<compile_context>
chip_gen: v7x
topology: tpu7x:2x2x1
jax: 0.10.0
libtpu: 0.0.40
codegen_flags: <defaults>
</compile_context>

<pallas_src>
import jax
import jax.numpy as jnp
from jax.experimental import pallas as pl
from jax.experimental.pallas import tpu as pltpu


def simple_nn_kernel(x_ref, w1_ref, b1_ref, w2_ref, b2_ref, o_ref):
    # x_ref : (tile_r, 128) f32 in VMEM -- batch slab, lane- and sublane-dense
    # w1_ref: (H,)  SMEM   b1_ref: (H,) SMEM   w2_ref: (H,) SMEM   b2_ref: (1,) SMEM
    # o_ref : (tile_r, 128) f32 in VMEM
    x = x_ref[...]
    H = w1_ref.shape[0]                       # static (32)
    acc = jnp.zeros_like(x)
    # Fused Linear(1,H) -> ReLU -> Linear(H,1): accumulate over hidden units
    # with scalar weights (scalar x vector VPU ops, no (H, tile) intermediate).
    for h in range(H):
        acc = acc + w2_ref[h] * jnp.maximum(w1_ref[h] * x + b1_ref[h], 0.0)
    o_ref[...] = (acc + b2_ref[0]).astype(o_ref.dtype)


def _pick_tile_r(num_rows, max_rows_per_tile=512, min_steps=8):
    """Rows-per-tile: big enough to amortize the ~0.35us/step overhead,
    sublane-aligned (multiple of 8), but keep >= min_steps grid steps so both
    v7x TensorCores get work on large batches."""
    if num_rows <= 8:
        return num_rows                        # full-extent first dim is allowed
    tile = min(max_rows_per_tile, max(8, pl.cdiv(num_rows, min_steps)))
    return ((tile + 7) // 8) * 8


def simple_nn_forward(x, w1, b1, w2, b2):
    """Forward pass of SimpleNN.

    x : (B, 1)   input (after the PyTorch `x.view(-1, 1)`)
    w1: (H, 1)   layer1.weight (PyTorch layout (out_features, in_features))
    b1: (H,)     layer1.bias
    w2: (1, H)   layer2.weight
    b2: (1,)     layer2.bias
    returns (B, 1)
    """
    B, In = x.shape
    assert In == 1, "module reshapes input to (-1, 1)"
    H = w1.shape[0]
    assert w2.shape == (1, H)

    lanes = 128
    flat = x.reshape(B)
    num_rows = pl.cdiv(B, lanes)
    b_pad = num_rows * lanes
    if b_pad != B:
        # TODO(synk): only hit for non-128-multiple batches; an in-kernel masked
        # tail store would avoid this extra HBM copy of x.
        flat = jnp.pad(flat, (0, b_pad - B))
    x2d = flat.reshape(num_rows, lanes)

    tile_r = _pick_tile_r(num_rows)
    grid = (pl.cdiv(num_rows, tile_r),)

    w1_s = w1.reshape(H).astype(jnp.float32)
    b1_s = b1.reshape(H).astype(jnp.float32)
    w2_s = w2.reshape(H).astype(jnp.float32)
    b2_s = b2.reshape(1).astype(jnp.float32)

    out2d = pl.pallas_call(
        simple_nn_kernel,
        out_shape=jax.ShapeDtypeStruct((num_rows, lanes), x.dtype),
        grid=grid,
        in_specs=[
            # x tile: new (tile_r, 128) batch slab each grid step (pipelined DMA).
            pl.BlockSpec((tile_r, lanes), lambda i: (i, 0)),
            # Tiny weights / biases: whole arrays in SMEM, read as scalars.
            pl.BlockSpec(memory_space=pltpu.MemorySpace.SMEM),
            pl.BlockSpec(memory_space=pltpu.MemorySpace.SMEM),
            pl.BlockSpec(memory_space=pltpu.MemorySpace.SMEM),
            pl.BlockSpec(memory_space=pltpu.MemorySpace.SMEM),
        ],
        out_specs=pl.BlockSpec((tile_r, lanes), lambda i: (i, 0)),
        compiler_params=pltpu.CompilerParams(
            dimension_semantics=("parallel",),       # megacore / 2-TC sharding
            vmem_limit_bytes=32 * 1024 * 1024,       # tiles are << this everywhere
        ),
    )(x2d, w1_s, b1_s, w2_s, b2_s)

    # Back to (B, 1), dropping any lane padding (padded lanes hold garbage
    # relu(b1)*w2 + b2 values and are sliced off here).
    return out2d.reshape(b_pad)[:B].reshape(B, 1)


def init_linear_params(key, in_features, out_features, dtype=jnp.float32):
    """PyTorch-style init, PyTorch layout: W is (out_features, in_features)."""
    kw, kb = jax.random.split(key)
    bound = 1.0 / jnp.sqrt(jnp.asarray(in_features, dtype))
    w = jax.random.uniform(kw, (out_features, in_features), dtype,
                           minval=-bound, maxval=bound)
    b = jax.random.uniform(kb, (out_features,), dtype,
                           minval=-bound, maxval=bound)
    return w, b


def _reference(x, w1, b1, w2, b2):
    # Exact PyTorch semantics: relu(x @ W1.T + b1) @ W2.T + b2.
    return jnp.maximum(x @ w1.T + b1, 0.0) @ w2.T + b2


if __name__ == "__main__":
    # Shapes implied by the module (`x.view(-1, 1)` -> input_size = 1).
    input_size = 1
    hidden_size = 32
    output_size = 1

    key = jax.random.PRNGKey(0)
    kx, k1, k2, kx2 = jax.random.split(key, 4)

    w1, b1 = init_linear_params(k1, input_size, hidden_size)    # (H, 1), (H,)
    w2, b2 = init_linear_params(k2, hidden_size, output_size)   # (1, H), (1,)

    # Main check: 128-aligned batch -> no wrapper pad, multi-step grid.
    batch = 2048
    x = jax.random.normal(kx, (batch, input_size), jnp.float32)
    y = jax.block_until_ready(simple_nn_forward(x, w1, b1, w2, b2))
    ref = _reference(x, w1, b1, w2, b2)
    assert y.shape == (batch, output_size)
    assert jnp.allclose(y, ref, atol=1e-5, rtol=1e-5)

    # Ragged check: non-multiple-of-128 batch exercises the pad + slice path.
    batch2 = 200
    x2 = jax.random.normal(kx2, (batch2, input_size), jnp.float32)
    y2 = jax.block_until_ready(simple_nn_forward(x2, w1, b1, w2, b2))
    ref2 = _reference(x2, w1, b1, w2, b2)
    assert y2.shape == (batch2, output_size)
    assert jnp.allclose(y2, ref2, atol=1e-5, rtol=1e-5)

    print("KERNEL_OK")
</pallas_src>

<mosaic_0001>
module attributes {stable_mosaic.version = 11 : i64} {
  func.func @simple_nn_kernel(%arg0: i32, %arg1: memref<8x128xf32, #tpu.memory_space<vmem>>, %arg2: memref<32xf32, #tpu.memory_space<smem>>, %arg3: memref<32xf32, #tpu.memory_space<smem>>, %arg4: memref<32xf32, #tpu.memory_space<smem>>, %arg5: memref<1xf32, #tpu.memory_space<smem>>, %arg6: memref<8x128xf32, #tpu.memory_space<vmem>>) attributes {dimension_semantics = [#tpu.dimension_semantics<parallel>], iteration_bounds = array<i64: 2>, scalar_prefetch = 0 : i64, scratch_operands = 0 : i64, tpu.core_type = #tpu.core_type<tc>, window_params = [{transform_indices = @transform_0, window_bounds = array<i64: 8, 128>}, {transform_indices = @transform_1, window_bounds = array<i64: 32>}, {transform_indices = @transform_2, window_bounds = array<i64: 32>}, {transform_indices = @transform_3, window_bounds = array<i64: 32>}, {transform_indices = @transform_4, window_bounds = array<i64: 1>}, {transform_indices = @transform_5, window_bounds = array<i64: 8, 128>}]} {
    %c0 = arith.constant 0 : index
    %c0_0 = arith.constant 0 : index
    %0 = vector.load %arg1[%c0, %c0_0] : memref<8x128xf32, #tpu.memory_space<vmem>>, vector<8x128xf32>
    %cst = arith.constant 0.000000e+00 : f32
    %1 = vector.broadcast %cst : f32 to vector<8x128xf32>
    %c0_1 = arith.constant 0 : index
    %2 = memref.load %arg4[%c0_1] : memref<32xf32, #tpu.memory_space<smem>>
    %c0_2 = arith.constant 0 : index
    %3 = memref.load %arg2[%c0_2] : memref<32xf32, #tpu.memory_space<smem>>
    %4 = vector.broadcast %3 : f32 to vector<8x128xf32>
    %5 = arith.mulf %4, %0 : vector<8x128xf32>
    %c0_3 = arith.constant 0 : index
    %6 = memref.load %arg3[%c0_3] : memref<32xf32, #tpu.memory_space<smem>>
    %7 = vector.broadcast %6 : f32 to vector<8x128xf32>
    %8 = arith.addf %5, %7 : vector<8x128xf32>
    %cst_4 = arith.constant 0.000000e+00 : f32
    %9 = vector.broadcast %cst_4 : f32 to vector<8x128xf32>
    %10 = arith.maximumf %8, %9 : vector<8x128xf32>
    %11 = vector.broadcast %2 : f32 to vector<8x128xf32>
    %12 = arith.mulf %11, %10 : vector<8x128xf32>
    %13 = arith.addf %1, %12 : vector<8x128xf32>
    %c1 = arith.constant 1 : index
    %14 = memref.load %arg4[%c1] : memref<32xf32, #tpu.memory_space<smem>>
    %c1_5 = arith.constant 1 : index
    %15 = memref.load %arg2[%c1_5] : memref<32xf32, #tpu.memory_space<smem>>
    %16 = vector.broadcast %15 : f32 to vector<8x128xf32>
    %17 = arith.mulf %16, %0 : vector<8x128xf32>
    %c1_6 = arith.constant 1 : index
    %18 = memref.load %arg3[%c1_6] : memref<32xf32, #tpu.memory_space<smem>>
    %19 = vector.broadcast %18 : f32 to vector<8x128xf32>
    %20 = arith.addf %17, %19 : vector<8x128xf32>
    %cst_7 = arith.constant 0.000000e+00 : f32
    %21 = vector.broadcast %cst_7 : f32 to vector<8x128xf32>
    %22 = arith.maximumf %20, %21 : vector<8x128xf32>
    %23 = vector.broadcast %14 : f32 to vector<8x128xf32>
    %24 = arith.mulf %23, %22 : vector<8x128xf32>
    %25 = arith.addf %13, %24 : vector<8x128xf32>
    %c2 = arith.constant 2 : index
    %26 = memref.load %arg4[%c2] : memref<32xf32, #tpu.memory_space<smem>>
    %c2_8 = arith.constant 2 : index
    %27 = memref.load %arg2[%c2_8] : memref<32xf32, #tpu.memory_space<smem>>
    %28 = vector.broadcast %27 : f32 to vector<8x128xf32>
    %29 = arith.mulf %28, %0 : vector<8x128xf32>
    %c2_9 = arith.constant 2 : index
    %30 = memref.load %arg3[%c2_9] : memref<32xf32, #tpu.memory_space<smem>>
    %31 = vector.broadcast %30 : f32 to vector<8x128xf32>
    %32 = arith.addf %29, %31 : vector<8x128xf32>
    %cst_10 = arith.constant 0.000000e+00 : f32
    %33 = vector.broadcast %cst_10 : f32 to vector<8x128xf32>
    %34 = arith.maximumf %32, %33 : vector<8x128xf32>
    %35 = vector.broadcast %26 : f32 to vector<8x128xf32>
    %36 = arith.mulf %35, %34 : vector<8x128xf32>
    %37 = arith.addf %25, %36 : vector<8x128xf32>
    %c3 = arith.constant 3 : index
    %38 = memref.load %arg4[%c3] : memref<32xf32, #tpu.memory_space<smem>>
    %c3_11 = arith.constant 3 : index
    %39 = memref.load %arg2[%c3_11] : memref<32xf32, #tpu.memory_space<smem>>
    %40 = vector.broadcast %39 : f32 to vector<8x128xf32>
    %41 = arith.mulf %40, %0 : vector<8x128xf32>
    %c3_12 = arith.constant 3 : index
    %42 = memref.load %arg3[%c3_12] : memref<32xf32, #tpu.memory_space<smem>>
    %43 = vector.broadcast %42 : f32 to vector<8x128xf32>
    %44 = arith.addf %41, %43 : vector<8x128xf32>
    %cst_13 = arith.constant 0.000000e+00 : f32
    %45 = vector.broadcast %cst_13 : f32 to vector<8x128xf32>
    %46 = arith.maximumf %44, %45 : vector<8x128xf32>
    %47 = vector.broadcast %38 : f32 to vector<8x128xf32>
    %48 = arith.mulf %47, %46 : vector<8x128xf32>
    %49 = arith.addf %37, %48 : vector<8x128xf32>
    %c4 = arith.constant 4 : index
    %50 = memref.load %arg4[%c4] : memref<32xf32, #tpu.memory_space<smem>>
    %c4_14 = arith.constant 4 : index
    %51 = memref.load %arg2[%c4_14] : memref<32xf32, #tpu.memory_space<smem>>
    %52 = vector.broadcast %51 : f32 to vector<8x128xf32>
    %53 = arith.mulf %52, %0 : vector<8x128xf32>
    %c4_15 = arith.constant 4 : index
    %54 = memref.load %arg3[%c4_15] : memref<32xf32, #tpu.memory_space<smem>>
    %55 = vector.broadcast %54 : f32 to vector<8x128xf32>
    %56 = arith.addf %53, %55 : vector<8x128xf32>
    %cst_16 = arith.constant 0.000000e+00 : f32
    %57 = vector.broadcast %cst_16 : f32 to vector<8x128xf32>
    %58 = arith.maximumf %56, %57 : vector<8x128xf32>
    %59 = vector.broadcast %50 : f32 to vector<8x128xf32>
    %60 = arith.mulf %59, %58 : vector<8x128xf32>
    %61 = arith.addf %49, %60 : vector<8x128xf32>
    %c5 = arith.constant 5 : index
    %62 = memref.load %arg4[%c5] : memref<32xf32, #tpu.memory_space<smem>>
    %c5_17 = arith.constant 5 : index
    %63 = memref.load %arg2[%c5_17] : memref<32xf32, #tpu.memory_space<smem>>
    %64 = vector.broadcast %63 : f32 to vector<8x128xf32>
    %65 = arith.mulf %64, %0 : vector<8x128xf32>
    %c5_18 = arith.constant 5 : index
    %66 = memref.load %arg3[%c5_18] : memref<32xf32, #tpu.memory_space<smem>>
    %67 = vector.broadcast %66 : f32 to vector<8x128xf32>
    %68 = arith.addf %65, %67 : vector<8x128xf32>
    %cst_19 = arith.constant 0.000000e+00 : f32
    %69 = vector.broadcast %cst_19 : f32 to vector<8x128xf32>
    %70 = arith.maximumf %68, %69 : vector<8x128xf32>
    %71 = vector.broadcast %62 : f32 to vector<8x128xf32>
    %72 = arith.mulf %71, %70 : vector<8x128xf32>
    %73 = arith.addf %61, %72 : vector<8x128xf32>
    %c6 = arith.constant 6 : index
    %74 = memref.load %arg4[%c6] : memref<32xf32, #tpu.memory_space<smem>>
    %c6_20 = arith.constant 6 : index
    %75 = memref.load %arg2[%c6_20] : memref<32xf32, #tpu.memory_space<smem>>
    %76 = vector.broadcast %75 : f32 to vector<8x128xf32>
    %77 = arith.mulf %76, %0 : vector<8x128xf32>
    %c6_21 = arith.constant 6 : index
    %78 = memref.load %arg3[%c6_21] : memref<32xf32, #tpu.memory_space<smem>>
    %79 = vector.broadcast %78 : f32 to vector<8x128xf32>
    %80 = arith.addf %77, %79 : vector<8x128xf32>
    %cst_22 = arith.constant 0.000000e+00 : f32
    %81 = vector.broadcast %cst_22 : f32 to vector<8x128xf32>
    %82 = arith.maximumf %80, %81 : vector<8x128xf32>
    %83 = vector.broadcast %74 : f32 to vector<8x128xf32>
    %84 = arith.mulf %83, %82 : vector<8x128xf32>
    %85 = arith.addf %73, %84 : vector<8x128xf32>
    %c7 = arith.constant 7 : index
    %86 = memref.load %arg4[%c7] : memref<32xf32, #tpu.memory_space<smem>>
    %c7_23 = arith.constant 7 : index
    %87 = memref.load %arg2[%c7_23] : memref<32xf32, #tpu.memory_space<smem>>
    %88 = vector.broadcast %87 : f32 to vector<8x128xf32>
    %89 = arith.mulf %88, %0 : vector<8x128xf32>
    %c7_24 = arith.constant 7 : index
    %90 = memref.load %arg3[%c7_24] : memref<32xf32, #tpu.memory_space<smem>>
    %91 = vector.broadcast %90 : f32 to vector<8x128xf32>
    %92 = arith.addf %89, %91 : vector<8x128xf32>
    %cst_25 = arith.constant 0.000000e+00 : f32
    %93 = vector.broadcast %cst_25 : f32 to vector<8x128xf32>
    %94 = arith.maximumf %92, %93 : vector<8x128xf32>
    %95 = vector.broadcast %86 : f32 to vector<8x128xf32>
    %96 = arith.mulf %95, %94 : vector<8x128xf32>
    %97 = arith.addf %85, %96 : vector<8x128xf32>
    %c8 = arith.constant 8 : index
    %98 = memref.load %arg4[%c8] : memref<32xf32, #tpu.memory_space<smem>>
    %c8_26 = arith.constant 8 : index
    %99 = memref.load %arg2[%c8_26] : memref<32xf32, #tpu.memory_space<smem>>
    %100 = vector.broadcast %99 : f32 to vector<8x128xf32>
    %101 = arith.mulf %100, %0 : vector<8x128xf32>
    %c8_27 = arith.constant 8 : index
    %102 = memref.load %arg3[%c8_27] : memref<32xf32, #tpu.memory_space<smem>>
    %103 = vector.broadcast %102 : f32 to vector<8x128xf32>
    %104 = arith.addf %101, %103 : vector<8x128xf32>
    %cst_28 = arith.constant 0.000000e+00 : f32
    %105 = vector.broadcast %cst_28 : f32 to vector<8x128xf32>
    %106 = arith.maximumf %104, %105 : vector<8x128xf32>
    %107 = vector.broadcast %98 : f32 to vector<8x128xf32>
    %108 = arith.mulf %107, %106 : vector<8x128xf32>
    %109 = arith.addf %97, %108 : vector<8x128xf32>
    %c9 = arith.constant 9 : index
    %110 = memref.load %arg4[%c9] : memref<32xf32, #tpu.memory_space<smem>>
    %c9_29 = arith.constant 9 : index
    %111 = memref.load %arg2[%c9_29] : memref<32xf32, #tpu.memory_space<smem>>
    %112 = vector.broadcast %111 : f32 to vector<8x128xf32>
    %113 = arith.mulf %112, %0 : vector<8x128xf32>
    %c9_30 = arith.constant 9 : index
    %114 = memref.load %arg3[%c9_30] : memref<32xf32, #tpu.memory_space<smem>>
    %115 = vector.broadcast %114 : f32 to vector<8x128xf32>
    %116 = arith.addf %113, %115 : vector<8x128xf32>
    %cst_31 = arith.constant 0.000000e+00 : f32
    %117 = vector.broadcast %cst_31 : f32 to vector<8x128xf32>
    %118 = arith.maximumf %116, %117 : vector<8x128xf32>
    %119 = vector.broadcast %110 : f32 to vector<8x128xf32>
    %120 = arith.mulf %119, %118 : vector<8x128xf32>
    %121 = arith.addf %109, %120 : vector<8x128xf32>
    %c10 = arith.constant 10 : index
    %122 = memref.load %arg4[%c10] : memref<32xf32, #tpu.memory_space<smem>>
    %c10_32 = arith.constant 10 : index
    %123 = memref.load %arg2[%c10_32] : memref<32xf32, #tpu.memory_space<smem>>
    %124 = vector.broadcast %123 : f32 to vector<8x128xf32>
    %125 = arith.mulf %124, %0 : vector<8x128xf32>
    %c10_33 = arith.constant 10 : index
    %126 = memref.load %arg3[%c10_33] : memref<32xf32, #tpu.memory_space<smem>>
    %127 = vector.broadcast %126 : f32 to vector<8x128xf32>
    %128 = arith.addf %125, %127 : vector<8x128xf32>
    %cst_34 = arith.constant 0.000000e+00 : f32
    %129 = vector.broadcast %cst_34 : f32 to vector<8x128xf32>
    %130 = arith.maximumf %128, %129 : vector<8x128xf32>
    %131 = vector.broadcast %122 : f32 to vector<8x128xf32>
    %132 = arith.mulf %131, %130 : vector<8x128xf32>
    %133 = arith.addf %121, %132 : vector<8x128xf32>
    %c11 = arith.constant 11 : index
    %134 = memref.load %arg4[%c11] : memref<32xf32, #tpu.memory_space<smem>>
    %c11_35 = arith.constant 11 : index
    %135 = memref.load %arg2[%c11_35] : memref<32xf32, #tpu.memory_space<smem>>
    %136 = vector.broadcast %135 : f32 to vector<8x128xf32>
    %137 = arith.mulf %136, %0 : vector<8x128xf32>
    %c11_36 = arith.constant 11 : index
    %138 = memref.load %arg3[%c11_36] : memref<32xf32, #tpu.memory_space<smem>>
    %139 = vector.broadcast %138 : f32 to vector<8x128xf32>
    %140 = arith.addf %137, %139 : vector<8x128xf32>
    %cst_37 = arith.constant 0.000000e+00 : f32
    %141 = vector.broadcast %cst_37 : f32 to vector<8x128xf32>
    %142 = arith.maximumf %140, %141 : vector<8x128xf32>
    %143 = vector.broadcast %134 : f32 to vector<8x128xf32>
    %144 = arith.mulf %143, %142 : vector<8x128xf32>
    %145 = arith.addf %133, %144 : vector<8x128xf32>
    %c12 = arith.constant 12 : index
    %146 = memref.load %arg4[%c12] : memref<32xf32, #tpu.memory_space<smem>>
    %c12_38 = arith.constant 12 : index
    %147 = memref.load %arg2[%c12_38] : memref<32xf32, #tpu.memory_space<smem>>
    %148 = vector.broadcast %147 : f32 to vector<8x128xf32>
    %149 = arith.mulf %148, %0 : vector<8x128xf32>
    %c12_39 = arith.constant 12 : index
    %150 = memref.load %arg3[%c12_39] : memref<32xf32, #tpu.memory_space<smem>>
    %151 = vector.broadcast %150 : f32 to vector<8x128xf32>
    %152 = arith.addf %149, %151 : vector<8x128xf32>
    %cst_40 = arith.constant 0.000000e+00 : f32
    %153 = vector.broadcast %cst_40 : f32 to vector<8x128xf32>
    %154 = arith.maximumf %152, %153 : vector<8x128xf32>
    %155 = vector.broadcast %146 : f32 to vector<8x128xf32>
    %156 = arith.mulf %155, %154 : vector<8x128xf32>
    %157 = arith.addf %145, %156 : vector<8x128xf32>
    %c13 = arith.constant 13 : index
    %158 = memref.load %arg4[%c13] : memref<32xf32, #tpu.memory_space<smem>>
    %c13_41 = arith.constant 13 : index
    %159 = memref.load %arg2[%c13_41] : memref<32xf32, #tpu.memory_space<smem>>
    %160 = vector.broadcast %159 : f32 to vector<8x128xf32>
    %161 = arith.mulf %160, %0 : vector<8x128xf32>
    %c13_42 = arith.constant 13 : index
    %162 = memref.load %arg3[%c13_42] : memref<32xf32, #tpu.memory_space<smem>>
    %163 = vector.broadcast %162 : f32 to vector<8x128xf32>
    %164 = arith.addf %161, %163 : vector<8x128xf32>
    %cst_43 = arith.constant 0.000000e+00 : f32
    %165 = vector.broadcast %cst_43 : f32 to vector<8x128xf32>
    %166 = arith.maximumf %164, %165 : vector<8x128xf32>
    %167 = vector.broadcast %158 : f32 to vector<8x128xf32>
    %168 = arith.mulf %167, %166 : vector<8x128xf32>
    %169 = arith.addf %157, %168 : vector<8x128xf32>
    %c14 = arith.constant 14 : index
    %170 = memref.load %arg4[%c14] : memref<32xf32, #tpu.memory_space<smem>>
    %c14_44 = arith.constant 14 : index
    %171 = memref.load %arg2[%c14_44] : memref<32xf32, #tpu.memory_space<smem>>
    %172 = vector.broadcast %171 : f32 to vector<8x128xf32>
    %173 = arith.mulf %172, %0 : vector<8x128xf32>
    %c14_45 = arith.constant 14 : index
    %174 = memref.load %arg3[%c14_45] : memref<32xf32, #tpu.memory_space<smem>>
    %175 = vector.broadcast %174 : f32 to vector<8x128xf32>
    %176 = arith.addf %173, %175 : vector<8x128xf32>
    %cst_46 = arith.constant 0.000000e+00 : f32
    %177 = vector.broadcast %cst_46 : f32 to vector<8x128xf32>
    %178 = arith.maximumf %176, %177 : vector<8x128xf32>
    %179 = vector.broadcast %170 : f32 to vector<8x128xf32>
    %180 = arith.mulf %179, %178 : vector<8x128xf32>
    %181 = arith.addf %169, %180 : vector<8x128xf32>
    %c15 = arith.constant 15 : index
    %182 = memref.load %arg4[%c15] : memref<32xf32, #tpu.memory_space<smem>>
    %c15_47 = arith.constant 15 : index
    %183 = memref.load %arg2[%c15_47] : memref<32xf32, #tpu.memory_space<smem>>
    %184 = vector.broadcast %183 : f32 to vector<8x128xf32>
    %185 = arith.mulf %184, %0 : vector<8x128xf32>
    %c15_48 = arith.constant 15 : index
    %186 = memref.load %arg3[%c15_48] : memref<32xf32, #tpu.memory_space<smem>>
    %187 = vector.broadcast %186 : f32 to vector<8x128xf32>
    %188 = arith.addf %185, %187 : vector<8x128xf32>
    %cst_49 = arith.constant 0.000000e+00 : f32
    %189 = vector.broadcast %cst_49 : f32 to vector<8x128xf32>
    %190 = arith.maximumf %188, %189 : vector<8x128xf32>
    %191 = vector.broadcast %182 : f32 to vector<8x128xf32>
    %192 = arith.mulf %191, %190 : vector<8x128xf32>
    %193 = arith.addf %181, %192 : vector<8x128xf32>
    %c16 = arith.constant 16 : index
    %194 = memref.load %arg4[%c16] : memref<32xf32, #tpu.memory_space<smem>>
    %c16_50 = arith.constant 16 : index
    %195 = memref.load %arg2[%c16_50] : memref<32xf32, #tpu.memory_space<smem>>
    %196 = vector.broadcast %195 : f32 to vector<8x128xf32>
    %197 = arith.mulf %196, %0 : vector<8x128xf32>
    %c16_51 = arith.constant 16 : index
    %198 = memref.load %arg3[%c16_51] : memref<32xf32, #tpu.memory_space<smem>>
    %199 = vector.broadcast %198 : f32 to vector<8x128xf32>
    %200 = arith.addf %197, %199 : vector<8x128xf32>
    %cst_52 = arith.constant 0.000000e+00 : f32
    %201 = vector.broadcast %cst_52 : f32 to vector<8x128xf32>
    %202 = arith.maximumf %200, %201 : vector<8x128xf32>
    %203 = vector.broadcast %194 : f32 to vector<8x128xf32>
    %204 = arith.mulf %203, %202 : vector<8x128xf32>
    %205 = arith.addf %193, %204 : vector<8x128xf32>
    %c17 = arith.constant 17 : index
    %206 = memref.load %arg4[%c17] : memref<32xf32, #tpu.memory_space<smem>>
    %c17_53 = arith.constant 17 : index
    %207 = memref.load %arg2[%c17_53] : memref<32xf32, #tpu.memory_space<smem>>
    %208 = vector.broadcast %207 : f32 to vector<8x128xf32>
    %209 = arith.mulf %208, %0 : vector<8x128xf32>
    %c17_54 = arith.constant 17 : index
    %210 = memref.load %arg3[%c17_54] : memref<32xf32, #tpu.memory_space<smem>>
    %211 = vector.broadcast %210 : f32 to vector<8x128xf32>
    %212 = arith.addf %209, %211 : vector<8x128xf32>
    %cst_55 = arith.constant 0.000000e+00 : f32
    %213 = vector.broadcast %cst_55 : f32 to vector<8x128xf32>
    %214 = arith.maximumf %212, %213 : vector<8x128xf32>
    %215 = vector.broadcast %206 : f32 to vector<8x128xf32>
    %216 = arith.mulf %215, %214 : vector<8x128xf32>
    %217 = arith.addf %205, %216 : vector<8x128xf32>
    %c18 = arith.constant 18 : index
    %218 = memref.load %arg4[%c18] : memref<32xf32, #tpu.memory_space<smem>>
    %c18_56 = arith.constant 18 : index
    %219 = memref.load %arg2[%c18_56] : memref<32xf32, #tpu.memory_space<smem>>
    %220 = vector.broadcast %219 : f32 to vector<8x128xf32>
    %221 = arith.mulf %220, %0 : vector<8x128xf32>
    %c18_57 = arith.constant 18 : index
    %222 = memref.load %arg3[%c18_57] : memref<32xf32, #tpu.memory_space<smem>>
    %223 = vector.broadcast %222 : f32 to vector<8x128xf32>
    %224 = arith.addf %221, %223 : vector<8x128xf32>
    %cst_58 = arith.constant 0.000000e+00 : f32
    %225 = vector.broadcast %cst_58 : f32 to vector<8x128xf32>
    %226 = arith.maximumf %224, %225 : vector<8x128xf32>
    %227 = vector.broadcast %218 : f32 to vector<8x128xf32>
    %228 = arith.mulf %227, %226 : vector<8x128xf32>
    %229 = arith.addf %217, %228 : vector<8x128xf32>
    %c19 = arith.constant 19 : index
    %230 = memref.load %arg4[%c19] : memref<32xf32, #tpu.memory_space<smem>>
    %c19_59 = arith.constant 19 : index
    %231 = memref.load %arg2[%c19_59] : memref<32xf32, #tpu.memory_space<smem>>
    %232 = vector.broadcast %231 : f32 to vector<8x128xf32>
    %233 = arith.mulf %232, %0 : vector<8x128xf32>
    %c19_60 = arith.constant 19 : index
    %234 = memref.load %arg3[%c19_60] : memref<32xf32, #tpu.memory_space<smem>>
    %235 = vector.broadcast %234 : f32 to vector<8x128xf32>
    %236 = arith.addf %233, %235 : vector<8x128xf32>
    %cst_61 = arith.constant 0.000000e+00 : f32
    %237 = vector.broadcast %cst_61 : f32 to vector<8x128xf32>
    %238 = arith.maximumf %236, %237 : vector<8x128xf32>
    %239 = vector.broadcast %230 : f32 to vector<8x128xf32>
    %240 = arith.mulf %239, %238 : vector<8x128xf32>
    %241 = arith.addf %229, %240 : vector<8x128xf32>
    %c20 = arith.constant 20 : index
    %242 = memref.load %arg4[%c20] : memref<32xf32, #tpu.memory_space<smem>>
    %c20_62 = arith.constant 20 : index
    %243 = memref.load %arg2[%c20_62] : memref<32xf32, #tpu.memory_space<smem>>
    %244 = vector.broadcast %243 : f32 to vector<8x128xf32>
    %245 = arith.mulf %244, %0 : vector<8x128xf32>
    %c20_63 = arith.constant 20 : index
    %246 = memref.load %arg3[%c20_63] : memref<32xf32, #tpu.memory_space<smem>>
    %247 = vector.broadcast %246 : f32 to vector<8x128xf32>
    %248 = arith.addf %245, %247 : vector<8x128xf32>
    %cst_64 = arith.constant 0.000000e+00 : f32
    %249 = vector.broadcast %cst_64 : f32 to vector<8x128xf32>
    %250 = arith.maximumf %248, %249 : vector<8x128xf32>
    %251 = vector.broadcast %242 : f32 to vector<8x128xf32>
    %252 = arith.mulf %251, %250 : vector<8x128xf32>
    %253 = arith.addf %241, %252 : vector<8x128xf32>
    %c21 = arith.constant 21 : index
    %254 = memref.load %arg4[%c21] : memref<32xf32, #tpu.memory_space<smem>>
    %c21_65 = arith.constant 21 : index
    %255 = memref.load %arg2[%c21_65] : memref<32xf32, #tpu.memory_space<smem>>
    %256 = vector.broadcast %255 : f32 to vector<8x128xf32>
    %257 = arith.mulf %256, %0 : vector<8x128xf32>
    %c21_66 = arith.constant 21 : index
    %258 = memref.load %arg3[%c21_66] : memref<32xf32, #tpu.memory_space<smem>>
    %259 = vector.broadcast %258 : f32 to vector<8x128xf32>
    %260 = arith.addf %257, %259 : vector<8x128xf32>
    %cst_67 = arith.constant 0.000000e+00 : f32
    %261 = vector.broadcast %cst_67 : f32 to vector<8x128xf32>
    %262 = arith.maximumf %260, %261 : vector<8x128xf32>
    %263 = vector.broadcast %254 : f32 to vector<8x128xf32>
    %264 = arith.mulf %263, %262 : vector<8x128xf32>
    %265 = arith.addf %253, %264 : vector<8x128xf32>
    %c22 = arith.constant 22 : index
    %266 = memref.load %arg4[%c22] : memref<32xf32, #tpu.memory_space<smem>>
    %c22_68 = arith.constant 22 : index
    %267 = memref.load %arg2[%c22_68] : memref<32xf32, #tpu.memory_space<smem>>
    %268 = vector.broadcast %267 : f32 to vector<8x128xf32>
    %269 = arith.mulf %268, %0 : vector<8x128xf32>
    %c22_69 = arith.constant 22 : index
    %270 = memref.load %arg3[%c22_69] : memref<32xf32, #tpu.memory_space<smem>>
    %271 = vector.broadcast %270 : f32 to vector<8x128xf32>
    %272 = arith.addf %269, %271 : vector<8x128xf32>
    %cst_70 = arith.constant 0.000000e+00 : f32
    %273 = vector.broadcast %cst_70 : f32 to vector<8x128xf32>
    %274 = arith.maximumf %272, %273 : vector<8x128xf32>
    %275 = vector.broadcast %266 : f32 to vector<8x128xf32>
    %276 = arith.mulf %275, %274 : vector<8x128xf32>
    %277 = arith.addf %265, %276 : vector<8x128xf32>
    %c23 = arith.constant 23 : index
    %278 = memref.load %arg4[%c23] : memref<32xf32, #tpu.memory_space<smem>>
    %c23_71 = arith.constant 23 : index
    %279 = memref.load %arg2[%c23_71] : memref<32xf32, #tpu.memory_space<smem>>
    %280 = vector.broadcast %279 : f32 to vector<8x128xf32>
    %281 = arith.mulf %280, %0 : vector<8x128xf32>
    %c23_72 = arith.constant 23 : index
    %282 = memref.load %arg3[%c23_72] : memref<32xf32, #tpu.memory_space<smem>>
    %283 = vector.broadcast %282 : f32 to vector<8x128xf32>
    %284 = arith.addf %281, %283 : vector<8x128xf32>
    %cst_73 = arith.constant 0.000000e+00 : f32
    %285 = vector.broadcast %cst_73 : f32 to vector<8x128xf32>
    %286 = arith.maximumf %284, %285 : vector<8x128xf32>
    %287 = vector.broadcast %278 : f32 to vector<8x128xf32>
    %288 = arith.mulf %287, %286 : vector<8x128xf32>
    %289 = arith.addf %277, %288 : vector<8x128xf32>
    %c24 = arith.constant 24 : index
    %290 = memref.load %arg4[%c24] : memref<32xf32, #tpu.memory_space<smem>>
    %c24_74 = arith.constant 24 : index
    %291 = memref.load %arg2[%c24_74] : memref<32xf32, #tpu.memory_space<smem>>
    %292 = vector.broadcast %291 : f32 to vector<8x128xf32>
    %293 = arith.mulf %292, %0 : vector<8x128xf32>
    %c24_75 = arith.constant 24 : index
    %294 = memref.load %arg3[%c24_75] : memref<32xf32, #tpu.memory_space<smem>>
    %295 = vector.broadcast %294 : f32 to vector<8x128xf32>
    %296 = arith.addf %293, %295 : vector<8x128xf32>
    %cst_76 = arith.constant 0.000000e+00 : f32
    %297 = vector.broadcast %cst_76 : f32 to vector<8x128xf32>
    %298 = arith.maximumf %296, %297 : vector<8x128xf32>
    %299 = vector.broadcast %290 : f32 to vector<8x128xf32>
    %300 = arith.mulf %299, %298 : vector<8x128xf32>
    %301 = arith.addf %289, %300 : vector<8x128xf32>
    %c25 = arith.constant 25 : index
    %302 = memref.load %arg4[%c25] : memref<32xf32, #tpu.memory_space<smem>>
    %c25_77 = arith.constant 25 : index
    %303 = memref.load %arg2[%c25_77] : memref<32xf32, #tpu.memory_space<smem>>
    %304 = vector.broadcast %303 : f32 to vector<8x128xf32>
    %305 = arith.mulf %304, %0 : vector<8x128xf32>
    %c25_78 = arith.constant 25 : index
    %306 = memref.load %arg3[%c25_78] : memref<32xf32, #tpu.memory_space<smem>>
    %307 = vector.broadcast %306 : f32 to vector<8x128xf32>
    %308 = arith.addf %305, %307 : vector<8x128xf32>
    %cst_79 = arith.constant 0.000000e+00 : f32
    %309 = vector.broadcast %cst_79 : f32 to vector<8x128xf32>
    %310 = arith.maximumf %308, %309 : vector<8x128xf32>
    %311 = vector.broadcast %302 : f32 to vector<8x128xf32>
    %312 = arith.mulf %311, %310 : vector<8x128xf32>
    %313 = arith.addf %301, %312 : vector<8x128xf32>
    %c26 = arith.constant 26 : index
    %314 = memref.load %arg4[%c26] : memref<32xf32, #tpu.memory_space<smem>>
    %c26_80 = arith.constant 26 : index
    %315 = memref.load %arg2[%c26_80] : memref<32xf32, #tpu.memory_space<smem>>
    %316 = vector.broadcast %315 : f32 to vector<8x128xf32>
    %317 = arith.mulf %316, %0 : vector<8x128xf32>
    %c26_81 = arith.constant 26 : index
    %318 = memref.load %arg3[%c26_81] : memref<32xf32, #tpu.memory_space<smem>>
    %319 = vector.broadcast %318 : f32 to vector<8x128xf32>
    %320 = arith.addf %317, %319 : vector<8x128xf32>
    %cst_82 = arith.constant 0.000000e+00 : f32
    %321 = vector.broadcast %cst_82 : f32 to vector<8x128xf32>
    %322 = arith.maximumf %320, %321 : vector<8x128xf32>
    %323 = vector.broadcast %314 : f32 to vector<8x128xf32>
    %324 = arith.mulf %323, %322 : vector<8x128xf32>
    %325 = arith.addf %313, %324 : vector<8x128xf32>
    %c27 = arith.constant 27 : index
    %326 = memref.load %arg4[%c27] : memref<32xf32, #tpu.memory_space<smem>>
    %c27_83 = arith.constant 27 : index
    %327 = memref.load %arg2[%c27_83] : memref<32xf32, #tpu.memory_space<smem>>
    %328 = vector.broadcast %327 : f32 to vector<8x128xf32>
    %329 = arith.mulf %328, %0 : vector<8x128xf32>
    %c27_84 = arith.constant 27 : index
    %330 = memref.load %arg3[%c27_84] : memref<32xf32, #tpu.memory_space<smem>>
    %331 = vector.broadcast %330 : f32 to vector<8x128xf32>
    %332 = arith.addf %329, %331 : vector<8x128xf32>
    %cst_85 = arith.constant 0.000000e+00 : f32
    %333 = vector.broadcast %cst_85 : f32 to vector<8x128xf32>
    %334 = arith.maximumf %332, %333 : vector<8x128xf32>
    %335 = vector.broadcast %326 : f32 to vector<8x128xf32>
    %336 = arith.mulf %335, %334 : vector<8x128xf32>
    %337 = arith.addf %325, %336 : vector<8x128xf32>
    %c28 = arith.constant 28 : index
    %338 = memref.load %arg4[%c28] : memref<32xf32, #tpu.memory_space<smem>>
    %c28_86 = arith.constant 28 : index
    %339 = memref.load %arg2[%c28_86] : memref<32xf32, #tpu.memory_space<smem>>
    %340 = vector.broadcast %339 : f32 to vector<8x128xf32>
    %341 = arith.mulf %340, %0 : vector<8x128xf32>
    %c28_87 = arith.constant 28 : index
    %342 = memref.load %arg3[%c28_87] : memref<32xf32, #tpu.memory_space<smem>>
    %343 = vector.broadcast %342 : f32 to vector<8x128xf32>
    %344 = arith.addf %341, %343 : vector<8x128xf32>
    %cst_88 = arith.constant 0.000000e+00 : f32
    %345 = vector.broadcast %cst_88 : f32 to vector<8x128xf32>
    %346 = arith.maximumf %344, %345 : vector<8x128xf32>
    %347 = vector.broadcast %338 : f32 to vector<8x128xf32>
    %348 = arith.mulf %347, %346 : vector<8x128xf32>
    %349 = arith.addf %337, %348 : vector<8x128xf32>
    %c29 = arith.constant 29 : index
    %350 = memref.load %arg4[%c29] : memref<32xf32, #tpu.memory_space<smem>>
    %c29_89 = arith.constant 29 : index
    %351 = memref.load %arg2[%c29_89] : memref<32xf32, #tpu.memory_space<smem>>
    %352 = vector.broadcast %351 : f32 to vector<8x128xf32>
    %353 = arith.mulf %352, %0 : vector<8x128xf32>
    %c29_90 = arith.constant 29 : index
    %354 = memref.load %arg3[%c29_90] : memref<32xf32, #tpu.memory_space<smem>>
    %355 = vector.broadcast %354 : f32 to vector<8x128xf32>
    %356 = arith.addf %353, %355 : vector<8x128xf32>
    %cst_91 = arith.constant 0.000000e+00 : f32
    %357 = vector.broadcast %cst_91 : f32 to vector<8x128xf32>
    %358 = arith.maximumf %356, %357 : vector<8x128xf32>
    %359 = vector.broadcast %350 : f32 to vector<8x128xf32>
    %360 = arith.mulf %359, %358 : vector<8x128xf32>
    %361 = arith.addf %349, %360 : vector<8x128xf32>
    %c30 = arith.constant 30 : index
    %362 = memref.load %arg4[%c30] : memref<32xf32, #tpu.memory_space<smem>>
    %c30_92 = arith.constant 30 : index
    %363 = memref.load %arg2[%c30_92] : memref<32xf32, #tpu.memory_space<smem>>
    %364 = vector.broadcast %363 : f32 to vector<8x128xf32>
    %365 = arith.mulf %364, %0 : vector<8x128xf32>
    %c30_93 = arith.constant 30 : index
    %366 = memref.load %arg3[%c30_93] : memref<32xf32, #tpu.memory_space<smem>>
    %367 = vector.broadcast %366 : f32 to vector<8x128xf32>
    %368 = arith.addf %365, %367 : vector<8x128xf32>
    %cst_94 = arith.constant 0.000000e+00 : f32
    %369 = vector.broadcast %cst_94 : f32 to vector<8x128xf32>
    %370 = arith.maximumf %368, %369 : vector<8x128xf32>
    %371 = vector.broadcast %362 : f32 to vector<8x128xf32>
    %372 = arith.mulf %371, %370 : vector<8x128xf32>
    %373 = arith.addf %361, %372 : vector<8x128xf32>
    %c31 = arith.constant 31 : index
    %374 = memref.load %arg4[%c31] : memref<32xf32, #tpu.memory_space<smem>>
    %c31_95 = arith.constant 31 : index
    %375 = memref.load %arg2[%c31_95] : memref<32xf32, #tpu.memory_space<smem>>
    %376 = vector.broadcast %375 : f32 to vector<8x128xf32>
    %377 = arith.mulf %376, %0 : vector<8x128xf32>
    %c31_96 = arith.constant 31 : index
    %378 = memref.load %arg3[%c31_96] : memref<32xf32, #tpu.memory_space<smem>>
    %379 = vector.broadcast %378 : f32 to vector<8x128xf32>
    %380 = arith.addf %377, %379 : vector<8x128xf32>
    %cst_97 = arith.constant 0.000000e+00 : f32
    %381 = vector.broadcast %cst_97 : f32 to vector<8x128xf32>
    %382 = arith.maximumf %380, %381 : vector<8x128xf32>
    %383 = vector.broadcast %374 : f32 to vector<8x128xf32>
    %384 = arith.mulf %383, %382 : vector<8x128xf32>
    %385 = arith.addf %373, %384 : vector<8x128xf32>
    %c0_98 = arith.constant 0 : index
    %386 = memref.load %arg5[%c0_98] : memref<1xf32, #tpu.memory_space<smem>>
    %387 = vector.broadcast %386 : f32 to vector<8x128xf32>
    %388 = arith.addf %385, %387 : vector<8x128xf32>
    %c0_99 = arith.constant 0 : index
    %c0_100 = arith.constant 0 : index
    %389 = vector.load %arg6[%c0_99, %c0_100] : memref<8x128xf32, #tpu.memory_space<vmem>>, vector<8x128xf32>
    tpu.vector_store %arg6[%c0_99, %c0_100], %388 {strides = array<i32>} : memref<8x128xf32, #tpu.memory_space<vmem>>, vector<8x128xf32>,
    return
  }
  func.func @transform_0(%arg0: i32) -> (i32, i32) {
    %c0_i32 = arith.constant 0 : i32
    %c0_i32_0 = arith.constant 0 : i32
    return %arg0, %c0_i32 : i32, i32
  }
  func.func @transform_1(%arg0: i32) -> i32 {
    %c0_i32 = arith.constant 0 : i32
    %c0_i32_0 = arith.constant 0 : i32
    return %c0_i32 : i32
  }
  func.func @transform_2(%arg0: i32) -> i32 {
    %c0_i32 = arith.constant 0 : i32
    %c0_i32_0 = arith.constant 0 : i32
    return %c0_i32 : i32
  }
  func.func @transform_3(%arg0: i32) -> i32 {
    %c0_i32 = arith.constant 0 : i32
    %c0_i32_0 = arith.constant 0 : i32
    return %c0_i32 : i32
  }
  func.func @transform_4(%arg0: i32) -> i32 {
    %c0_i32 = arith.constant 0 : i32
    %c0_i32_0 = arith.constant 0 : i32
    return %c0_i32 : i32
  }
  func.func @transform_5(%arg0: i32) -> (i32, i32) {
    %c0_i32 = arith.constant 0 : i32
    %c0_i32_0 = arith.constant 0 : i32
    return %arg0, %c0_i32 : i32, i32
  }
}

</mosaic_0001>

<llo_original>
// kernel: tpu_custom_call.1
$region0: #{tpu_custom_call.1}
  #allocation0 [shape = 'u32[]', space=smem, size = 0x4, offset = 0x4, fixed_abs, tag = 'smem constant byte address 0x4 - core index']
  #allocation1 [shape = 'u32[144,128]{1,0:T(1,128)}', space=vmem, size = 0x12000, scoped, tag = 'internal scratch']
  #allocation2 [shape = 'f32[1]{0:T(128)S(6)}', space=smem, size = 0x200, scoped, tag = 'scoped memory for tpu_custom_call.1']
  %s0 = inlined_call_operand.hbm [shape: f32[16,128], index: 0, kind: input, shape index: {}]
  %s1 = inlined_call_operand.vmem [shape: f32[32], index: 1, kind: input, shape index: {}]
  %s2 = inlined_call_operand.vmem [shape: f32[32], index: 2, kind: input, shape index: {}]
  %s3 = inlined_call_operand.vmem [shape: f32[32], index: 3, kind: input, shape index: {}]
  %s4 = inlined_call_operand.<no memory space> [shape: f32[1], index: 4, kind: input, shape index: {}]
  %s5 = inlined_call_operand.hbm [shape: f32[16,128], index: 5, kind: output, shape index: {}]
  %s6 = sld [smem:[#allocation0]]
  $region69: #{tpu_custom_call.1} parent=0
    _
  %s8 = ssub.s32 1, %s6
  %s9 = scalar_select 0, %s8, %s6
  %10 = sst [smem:[#allocation2]] %s4
  $region1: #{tpu_custom_call.1} parent=0
    #allocation3 [shape = 'u8[8192]{0}', space=vmem, size = 0x2000, scoped, tag = 'input window, operand 0']
    #allocation4 [shape = 's32[2]{0}', space=sflag, size = 0x8, scoped, tag = 'scoped memory for tpu_custom_call.1']
    #allocation5 [shape = 's32[2]{0}', space=sflag, size = 0x8, scoped, tag = 'scoped memory for tpu_custom_call.1']
    #allocation6 [shape = 's32[2]{0}', space=sflag, size = 0x8, scoped, tag = 'scoped memory for tpu_custom_call.1']
    #allocation7 [shape = 'u8[512]{0}', space=smem, size = 0x200, scoped, tag = 'input window, operand 1, single buffered']
    #allocation8 [shape = 'u8[512]{0}', space=smem, size = 0x200, scoped, tag = 'input window, operand 2, single buffered']
    #allocation9 [shape = 's32[1]{0}', space=sflag, size = 0x4, scoped, tag = 'scoped memory for tpu_custom_call.1']
    #allocation10 [shape = 'u8[512]{0}', space=smem, size = 0x200, scoped, tag = 'input window, operand 3, single buffered']
    #allocation11 [shape = 'u8[8192]{0}', space=vmem, size = 0x2000, scoped, tag = 'output window, operand 0']
    %11 = vsyncpa [#allocation4], 0
    %s12 = scalar_lea.sflag [#allocation4], 1
    %13 = vsyncpa %s12, 0
    %14 = vsyncpa [#allocation6], 0
    %15 = vsyncpa [#allocation9], 0
    %16 = vsyncpa [#allocation5], 0
    %s17 = scalar_lea.sflag [#allocation5], 1
    %18 = vsyncpa %s17, 0
    loop: start=0, step=1, limit=4
    $region2: #{tpu_custom_call.1} parent=1 // loop_pre_header
      _
    $region3: #{tpu_custom_call.1} parent=1 // loop_header
      %s20 = sphi 0, %s24
      %p21 = scmp.ge.s32.totalorder %s20, 4
      %s30 = sphi 0, %s32
      %s33 = sphi 0, %s30
      %s34 = sphi 0, %s33
      %s50 = sphi 0, %s34
      %s54 = sphi 0, %s54
      %s56 = sphi 0, %s54
      %s57 = sphi 0, %s56
      %s71 = sphi 0, %s57
      %s75 = sphi 0, %s75
      %s77 = sphi 0, %s75
      %s78 = sphi 0, %s77
      %s92 = sphi 0, %s78
      %s96 = sphi 0, %s96
      %s98 = sphi 0, %s96
      %s99 = sphi 0, %s98
      %s113 = sphi 0, %s99
      %s117 = sphi 0, %s117
      %s119 = sphi 0, %s117
      %s120 = sphi 0, %s119
      %s134 = sphi 0, %s120
      %s140 = sphi 0, %s142
      %s143 = sphi 0, %s140
      %s144 = sphi 0, %s143
      %s160 = sphi 0, %s144
    $region4: #{tpu_custom_call.1} parent=1 // loop_header_branch
      %23 = sbr.rel (%p21) target = $region8
    $region5: #{tpu_custom_call.1} parent=1 // loop_body
      %s25 = ssub.s32 %s20, 1
      %s26 = ssub.s32 %s20, 2
      %s27 = sadd.s32 %s20, 1
      %s28 = ssub.s32 %s20, %s27
      %p29 = scmp.eq.s32.totalorder %s28, 0
      %s31 = sadd.s32 %s30, 1
      %s32 = scalar_select %p29, %s30, %s31
      %p35 = pneg %p29
      %p36 = scmp.eq.s32.totalorder %s20, 1
      %p37 = por %p35, %p36
      %p38 = scmp.ne.s32.totalorder %s30, %s33
      %p39 = scmp.eq.s32.totalorder %s20, 0
      %p40 = por %p38, %p39
      %p41 = scmp.ne.s32.totalorder %s30, %s33
      %p42 = scmp.eq.s32.totalorder %s25, 1
      %p43 = por %p41, %p42
      %p44 = scmp.ne.s32.totalorder %s33, %s34
      %p45 = scmp.eq.s32.totalorder %s25, 0
      %p46 = por %p44, %p45
      %p47 = scmp.ne.s32.totalorder %s33, %s34
      %p48 = scmp.eq.s32.totalorder %s26, 1
      %p49 = por %p47, %p48
      %p51 = scmp.ne.s32.totalorder %s34, %s50
      %p52 = scmp.eq.s32.totalorder %s26, 0
      %p53 = por %p51, %p52
      %s55 = sadd.s32 %s54, 1
      %p58 = scmp.eq.s32.totalorder %s20, 1
      %p59 = scmp.ne.s32.totalorder %s54, %s56
      %p60 = scmp.eq.s32.totalorder %s20, 0
      %p61 = por %p59, %p60
      %p62 = scmp.ne.s32.totalorder %s54, %s56
      %p63 = scmp.eq.s32.totalorder %s25, 1
      %p64 = por %p62, %p63
      %p65 = scmp.ne.s32.totalorder %s56, %s57
      %p66 = scmp.eq.s32.totalorder %s25, 0
      %p67 = por %p65, %p66
      %p68 = scmp.ne.s32.totalorder %s56, %s57
      %p69 = scmp.eq.s32.totalorder %s26, 1
      %p70 = por %p68, %p69
      %p72 = scmp.ne.s32.totalorder %s57, %s71
      %p73 = scmp.eq.s32.totalorder %s26, 0
      %p74 = por %p72, %p73
      %s76 = sadd.s32 %s75, 1
      %p79 = scmp.eq.s32.totalorder %s20, 1
      %p80 = scmp.ne.s32.totalorder %s75, %s77
      %p81 = scmp.eq.s32.totalorder %s20, 0
      %p82 = por %p80, %p81
      %p83 = scmp.ne.s32.totalorder %s75, %s77
      %p84 = scmp.eq.s32.totalorder %s25, 1
      %p85 = por %p83, %p84
      %p86 = scmp.ne.s32.totalorder %s77, %s78
      %p87 = scmp.eq.s32.totalorder %s25, 0
      %p88 = por %p86, %p87
      %p89 = scmp.ne.s32.totalorder %s77, %s78
      %p90 = scmp.eq.s32.totalorder %s26, 1
      %p91 = por %p89, %p90
      %p93 = scmp.ne.s32.totalorder %s78, %s92
      %p94 = scmp.eq.s32.totalorder %s26, 0
      %p95 = por %p93, %p94
      %s97 = sadd.s32 %s96, 1
      %p100 = scmp.eq.s32.totalorder %s20, 1
      %p101 = scmp.ne.s32.totalorder %s96, %s98
      %p102 = scmp.eq.s32.totalorder %s20, 0
      %p103 = por %p101, %p102
      %p104 = scmp.ne.s32.totalorder %s96, %s98
      %p105 = scmp.eq.s32.totalorder %s25, 1
      %p106 = por %p104, %p105
      %p107 = scmp.ne.s32.totalorder %s98, %s99
      %p108 = scmp.eq.s32.totalorder %s25, 0
      %p109 = por %p107, %p108
      %p110 = scmp.ne.s32.totalorder %s98, %s99
      %p111 = scmp.eq.s32.totalorder %s26, 1
      %p112 = por %p110, %p111
      %p114 = scmp.ne.s32.totalorder %s99, %s113
      %p115 = scmp.eq.s32.totalorder %s26, 0
      %p116 = por %p114, %p115
      %s118 = sadd.s32 %s117, 1
      %p121 = scmp.eq.s32.totalorder %s20, 1
      %p122 = scmp.ne.s32.totalorder %s117, %s119
      %p123 = scmp.eq.s32.totalorder %s20, 0
      %p124 = por %p122, %p123
      %p125 = scmp.ne.s32.totalorder %s117, %s119
      %p126 = scmp.eq.s32.totalorder %s25, 1
      %p127 = por %p125, %p126
      %p128 = scmp.ne.s32.totalorder %s119, %s120
      %p129 = scmp.eq.s32.totalorder %s25, 0
      %p130 = por %p128, %p129
      %p131 = scmp.ne.s32.totalorder %s119, %s120
      %p132 = scmp.eq.s32.totalorder %s26, 1
      %p133 = por %p131, %p132
      %p135 = scmp.ne.s32.totalorder %s120, %s134
      %p136 = scmp.eq.s32.totalorder %s26, 0
      %p137 = por %p135, %p136
      %s138 = ssub.s32 %s20, %s27
      %p139 = scmp.eq.s32.totalorder %s138, 0
      %s141 = sadd.s32 %s140, 1
      %s142 = scalar_select %p139, %s140, %s141
      %p145 = pneg %p139
      %p146 = scmp.eq.s32.totalorder %s20, 1
      %p147 = por %p145, %p146
      %p148 = scmp.ne.s32.totalorder %s140, %s143
      %p149 = scmp.eq.s32.totalorder %s20, 0
      %p150 = por %p148, %p149
      %p151 = scmp.ne.s32.totalorder %s140, %s143
      %p152 = scmp.eq.s32.totalorder %s25, 1
      %p153 = por %p151, %p152
      %p154 = scmp.ne.s32.totalorder %s143, %s144
      %p155 = scmp.eq.s32.totalorder %s25, 0
      %p156 = por %p154, %p155
      %p157 = scmp.ne.s32.totalorder %s143, %s144
      %p158 = scmp.eq.s32.totalorder %s26, 1
      %p159 = por %p157, %p158
      %p161 = scmp.ne.s32.totalorder %s144, %s160
      %p162 = scmp.eq.s32.totalorder %s26, 0
      %p163 = por %p161, %p162
      %p164 = scmp.le.s32.totalorder 1, %s20
      %p165 = scmp.lt.s32.totalorder %s20, 3
      %p166 = pnand %p164, %p165
      %p167 = pneg %p166
      // Predicated region
      $region9: #{tpu_custom_call.1} parent=5 // pred_check
        _
      $region10: #{tpu_custom_call.1} parent=5 // pred_check_branch
        %169 = sbr.rel (%p166) target = $region12
      $region11: #{tpu_custom_call.1} parent=5 // pred_region
        %s170 = ssub.s32 %s20, 1
        // Predicated region
        $region13: #{tpu_custom_call.1} parent=11 // pred_check
          %p171 = pneg %p67
        $region14: #{tpu_custom_call.1} parent=11 // pred_check_branch
          %173 = sbr.rel (%p171) target = $region16
        $region15: #{tpu_custom_call.1} parent=11 // pred_region
          %s175 = ssub.s32 16, 16
          %176 = vsyncadd [#allocation6], %s175
          %s178 = sshll.u32 %s1, 4
          %s179 = int_to_ptr.vmem [resolvable:$true] %s178
          %181 = dma.vmem_to_smem %s179, 16, [#allocation7], [#allocation6]
        $region16: #{tpu_custom_call.1} parent=11 // pred_fallthru
          _
        // Predicated region
        $region17: #{tpu_custom_call.1} parent=11 // pred_check
          %p182 = pneg %p88
        $region18: #{tpu_custom_call.1} parent=11 // pred_check_branch
          %184 = sbr.rel (%p182) target = $region20
        $region19: #{tpu_custom_call.1} parent=11 // pred_region
          %s186 = ssub.s32 16, 16
          %187 = vsyncadd [#allocation9], %s186
          %s189 = sshll.u32 %s2, 4
          %s190 = int_to_ptr.vmem [resolvable:$true] %s189
          %192 = dma.vmem_to_smem %s190, 16, [#allocation8], [#allocation9]
        $region20: #{tpu_custom_call.1} parent=11 // pred_fallthru
          _
        // Predicated region
        $region21: #{tpu_custom_call.1} parent=11 // pred_check
          %p193 = pneg %p109
        $region22: #{tpu_custom_call.1} parent=11 // pred_check_branch
          %195 = sbr.rel (%p193) target = $region24
        $region23: #{tpu_custom_call.1} parent=11 // pred_region
          %s197 = ssub.s32 16, 16
          %198 = vsyncadd [#allocation9], %s197
          %s200 = sshll.u32 %s3, 4
          %s201 = int_to_ptr.vmem [resolvable:$true] %s200
          %203 = dma.vmem_to_smem %s201, 16, [#allocation10], [#allocation9]
        $region24: #{tpu_custom_call.1} parent=11 // pred_fallthru
          _
        // Predicated region
        $region25: #{tpu_custom_call.1} parent=11 // pred_check
          %p204 = pneg %p130
        $region26: #{tpu_custom_call.1} parent=11 // pred_check_branch
          %206 = sbr.rel (%p204) target = $region28
        $region27: #{tpu_custom_call.1} parent=11 // pred_region
          _
        $region28: #{tpu_custom_call.1} parent=11 // pred_fallthru
          _
      $region12: #{tpu_custom_call.1} parent=5 // pred_fallthru
        _
      %p207 = scmp.lt.s32.totalorder %s20, 2
      // Predicated region
      $region29: #{tpu_custom_call.1} parent=5 // pred_check
        %p208 = pneg %p207
      $region30: #{tpu_custom_call.1} parent=5 // pred_check_branch
        %210 = sbr.rel (%p208) target = $region32
      $region31: #{tpu_custom_call.1} parent=5 // pred_region
        // Predicated region
        $region33: #{tpu_custom_call.1} parent=31 // pred_check
          %p211 = pneg %p40
        $region34: #{tpu_custom_call.1} parent=31 // pred_check_branch
          %213 = sbr.rel (%p211) target = $region36
        $region35: #{tpu_custom_call.1} parent=31 // pred_region
          %s214 = sand.u32 %s30, 1
          %s215 = scalar_lea.sflag [#allocation4], %s214
          %s216 = sand.u32 %s30, 1
          %s217 = smul.addr %s216, 8
          %s218 = scalar_lea.vmem [#allocation3], %s217
          %s220 = ssub.s32 128, 128
          %221 = vsyncadd %s215, %s220
          %s222 = smul.addr %s20, 128
          %s223 = scalar_lea.hbm %s0, %s222
          %s225 = sshll.u32 %s218, 4
          %s226 = int_to_ptr.vmem [resolvable:$true] %s225
          %228 = dma.hbm_to_vmem [thread:$0]  %s223, 128, %s226, %s215
        $region36: #{tpu_custom_call.1} parent=31 // pred_fallthru
          _
      $region32: #{tpu_custom_call.1} parent=5 // pred_fallthru
        _
      %p229 = scmp.le.s32.totalorder 1, %s20
      %p230 = scmp.lt.s32.totalorder %s20, 3
      %p231 = pnand %p229, %p230
      %p232 = pneg %p231
      // Predicated region
      $region37: #{tpu_custom_call.1} parent=5 // pred_check
        _
      $region38: #{tpu_custom_call.1} parent=5 // pred_check_branch
        %234 = sbr.rel (%p231) target = $region40
      $region39: #{tpu_custom_call.1} parent=5 // pred_region
        %s235 = ssub.s32 %s20, 1
        %s236 = sand.u32 %s33, 1
        %s237 = scalar_lea.sflag [#allocation4], %s236
        %s238 = sand.u32 %s33, 1
        %s239 = smul.addr %s238, 8
        %s240 = scalar_lea.vmem [#allocation3], %s239
        // Predicated region
        $region41: #{tpu_custom_call.1} parent=39 // pred_check
          %p241 = pneg %p46
        $region42: #{tpu_custom_call.1} parent=39 // pred_check_branch
          %243 = sbr.rel (%p241) target = $region44
        $region43: #{tpu_custom_call.1} parent=39 // pred_region
          %244 = dma.done %s237, 128
        $region44: #{tpu_custom_call.1} parent=39 // pred_fallthru
          _
        // Predicated region
        $region45: #{tpu_custom_call.1} parent=39 // pred_check
          %p245 = pneg %p67
        $region46: #{tpu_custom_call.1} parent=39 // pred_check_branch
          %247 = sbr.rel (%p245) target = $region48
        $region47: #{tpu_custom_call.1} parent=39 // pred_region
          %248 = dma.done [#allocation6], 16
        $region48: #{tpu_custom_call.1} parent=39 // pred_fallthru
          _
        // Predicated region
        $region49: #{tpu_custom_call.1} parent=39 // pred_check
          %p249 = pneg %p88
        $region50: #{tpu_custom_call.1} parent=39 // pred_check_branch
          %251 = sbr.rel (%p249) target = $region52
        $region51: #{tpu_custom_call.1} parent=39 // pred_region
          %252 = dma.done [#allocation9], 16
        $region52: #{tpu_custom_call.1} parent=39 // pred_fallthru
          _
        // Predicated region
        $region53: #{tpu_custom_call.1} parent=39 // pred_check
          %p253 = pneg %p109
        $region54: #{tpu_custom_call.1} parent=39 // pred_check_branch
          %255 = sbr.rel (%p253) target = $region56
        $region55: #{tpu_custom_call.1} parent=39 // pred_region
          %256 = dma.done [#allocation9], 16
        $region56: #{tpu_custom_call.1} parent=39 // pred_fallthru
          _
        %257 = sfence
        %s258 = sand.u32 %s33, 1
        %s259 = scalar_lea.sflag [#allocation4], %s258
        %s260 = sand.u32 %s33, 1
        %s261 = smul.addr %s260, 8
        %s262 = scalar_lea.vmem [#allocation3], %s261
        %p263 = pneg %p46
        %p264 = pneg %p43
        %p265 = pneg %p67
        %p266 = pneg %p64
        %p267 = pneg %p88
        %p268 = pneg %p85
        %p269 = pneg %p109
        %p270 = pneg %p106
        %p271 = pneg %p130
        %p272 = pneg %p127
        %p273 = pneg %p156
        %p274 = pneg %p153
        %s275 = sand.u32 %s143, 1
        %s276 = scalar_lea.sflag [#allocation5], %s275
        %s277 = sand.u32 %s143, 1
        %s278 = smul.addr %s277, 8
        %s279 = scalar_lea.vmem [#allocation11], %s278
        %v280 = vld [vmem:[%s240] sm:$0xff]
        %s281 = sld [smem:[#allocation10]]
        %s282 = sld [smem:[#allocation7]]
        %v283 = vstv %s282
        %v284 = vmul.f32 %v283, %v280
        %s285 = sld [smem:[#allocation8]]
        %v286 = vstv %s285
        %v287 = vadd.f32 %v284, %v286
        %v288 = vmax.f32 %v287, 0.0
        %v289 = vstv %s281
        %v290 = vmul.f32 %v289, %v288
        %v291 = vadd.f32 %v290, 0.0
        %s292 = sld [smem:[#allocation10 + $0x1]]
        %s293 = sld [smem:[#allocation7 + $0x1]]
        %v294 = vstv %s293
        %v295 = vmul.f32 %v294, %v280
        %s296 = sld [smem:[#allocation8 + $0x1]]
        %v297 = vstv %s296
        %v298 = vadd.f32 %v295, %v297
        %v299 = vmax.f32 %v298, 0.0
        %v300 = vstv %s292
        %v301 = vmul.f32 %v300, %v299
        %v302 = vadd.f32 %v291, %v301
        %s303 = sld [smem:[#allocation10 + $0x2]]
        %s304 = sld [smem:[#allocation7 + $0x2]]
        %v305 = vstv %s304
        %v306 = vmul.f32 %v305, %v280
        %s307 = sld [smem:[#allocation8 + $0x2]]
        %v308 = vstv %s307
        %v309 = vadd.f32 %v306, %v308
        %v310 = vmax.f32 %v309, 0.0
        %v311 = vstv %s303
        %v312 = vmul.f32 %v311, %v310
        %v313 = vadd.f32 %v302, %v312
        %s314 = sld [smem:[#allocation10 + $0x3]]
        %s315 = sld [smem:[#allocation7 + $0x3]]
        %v316 = vstv %s315
        %v317 = vmul.f32 %v316, %v280
        %s318 = sld [smem:[#allocation8 + $0x3]]
        %v319 = vstv %s318
        %v320 = vadd.f32 %v317, %v319
        %v321 = vmax.f32 %v320, 0.0
        %v322 = vstv %s314
        %v323 = vmul.f32 %v322, %v321
        %v324 = vadd.f32 %v313, %v323
        %s325 = sld [smem:[#allocation10 + $0x4]]
        %s326 = sld [smem:[#allocation7 + $0x4]]
        %v327 = vstv %s326
        %v328 = vmul.f32 %v327, %v280
        %s329 = sld [smem:[#allocation8 + $0x4]]
        %v330 = vstv %s329
        %v331 = vadd.f32 %v328, %v330
        %v332 = vmax.f32 %v331, 0.0
        %v333 = vstv %s325
        %v334 = vmul.f32 %v333, %v332
        %v335 = vadd.f32 %v324, %v334
        %s336 = sld [smem:[#allocation10 + $0x5]]
        %s337 = sld [smem:[#allocation7 + $0x5]]
        %v338 = vstv %s337
        %v339 = vmul.f32 %v338, %v280
        %s340 = sld [smem:[#allocation8 + $0x5]]
        %v341 = vstv %s340
        %v342 = vadd.f32 %v339, %v341
        %v343 = vmax.f32 %v342, 0.0
        %v344 = vstv %s336
        %v345 = vmul.f32 %v344, %v343
        %v346 = vadd.f32 %v335, %v345
        %s347 = sld [smem:[#allocation10 + $0x6]]
        %s348 = sld [smem:[#allocation7 + $0x6]]
        %v349 = vstv %s348
        %v350 = vmul.f32 %v349, %v280
        %s351 = sld [smem:[#allocation8 + $0x6]]
        %v352 = vstv %s351
        %v353 = vadd.f32 %v350, %v352
        %v354 = vmax.f32 %v353, 0.0
        %v355 = vstv %s347
        %v356 = vmul.f32 %v355, %v354
        %v357 = vadd.f32 %v346, %v356
        %s358 = sld [smem:[#allocation10 + $0x7]]
        %s359 = sld [smem:[#allocation7 + $0x7]]
        %v360 = vstv %s359
        %v361 = vmul.f32 %v360, %v280
        %s362 = sld [smem:[#allocation8 + $0x7]]
        %v363 = vstv %s362
        %v364 = vadd.f32 %v361, %v363
        %v365 = vmax.f32 %v364, 0.0
        %v366 = vstv %s358
        %v367 = vmul.f32 %v366, %v365
        %v368 = vadd.f32 %v357, %v367
        %s369 = sld [smem:[#allocation10 + $0x8]]
        %s370 = sld [smem:[#allocation7 + $0x8]]
        %v371 = vstv %s370
        %v372 = vmul.f32 %v371, %v280
        %s373 = sld [smem:[#allocation8 + $0x8]]
        %v374 = vstv %s373
        %v375 = vadd.f32 %v372, %v374
        %v376 = vmax.f32 %v375, 0.0
        %v377 = vstv %s369
        %v378 = vmul.f32 %v377, %v376
        %v379 = vadd.f32 %v368, %v378
        %s380 = sld [smem:[#allocation10 + $0x9]]
        %s381 = sld [smem:[#allocation7 + $0x9]]
        %v382 = vstv %s381
        %v383 = vmul.f32 %v382, %v280
        %s384 = sld [smem:[#allocation8 + $0x9]]
        %v385 = vstv %s384
        %v386 = vadd.f32 %v383, %v385
        %v387 = vmax.f32 %v386, 0.0
        %v388 = vstv %s380
        %v389 = vmul.f32 %v388, %v387
        %v390 = vadd.f32 %v379, %v389
        %s391 = sld [smem:[#allocation10 + $0xa]]
        %s392 = sld [smem:[#allocation7 + $0xa]]
        %v393 = vstv %s392
        %v394 = vmul.f32 %v393, %v280
        %s395 = sld [smem:[#allocation8 + $0xa]]
        %v396 = vstv %s395
        %v397 = vadd.f32 %v394, %v396
        %v398 = vmax.f32 %v397, 0.0
        %v399 = vstv %s391
        %v400 = vmul.f32 %v399, %v398
        %v401 = vadd.f32 %v390, %v400
        %s402 = sld [smem:[#allocation10 + $0xb]]
        %s403 = sld [smem:[#allocation7 + $0xb]]
        %v404 = vstv %s403
        %v405 = vmul.f32 %v404, %v280
        %s406 = sld [smem:[#allocation8 + $0xb]]
        %v407 = vstv %s406
        %v408 = vadd.f32 %v405, %v407
        %v409 = vmax.f32 %v408, 0.0
        %v410 = vstv %s402
        %v411 = vmul.f32 %v410, %v409
        %v412 = vadd.f32 %v401, %v411
        %s413 = sld [smem:[#allocation10 + $0xc]]
        %s414 = sld [smem:[#allocation7 + $0xc]]
        %v415 = vstv %s414
        %v416 = vmul.f32 %v415, %v280
        %s417 = sld [smem:[#allocation8 + $0xc]]
        %v418 = vstv %s417
        %v419 = vadd.f32 %v416, %v418
        %v420 = vmax.f32 %v419, 0.0
        %v421 = vstv %s413
        %v422 = vmul.f32 %v421, %v420
        %v423 = vadd.f32 %v412, %v422
        %s424 = sld [smem:[#allocation10 + $0xd]]
        %s425 = sld [smem:[#allocation7 + $0xd]]
        %v426 = vstv %s425
        %v427 = vmul.f32 %v426, %v280
        %s428 = sld [smem:[#allocation8 + $0xd]]
        %v429 = vstv %s428
        %v430 = vadd.f32 %v427, %v429
        %v431 = vmax.f32 %v430, 0.0
        %v432 = vstv %s424
        %v433 = vmul.f32 %v432, %v431
        %v434 = vadd.f32 %v423, %v433
        %s435 = sld [smem:[#allocation10 + $0xe]]
        %s436 = sld [smem:[#allocation7 + $0xe]]
        %v437 = vstv %s436
        %v438 = vmul.f32 %v437, %v280
        %s439 = sld [smem:[#allocation8 + $0xe]]
        %v440 = vstv %s439
        %v441 = vadd.f32 %v438, %v440
        %v442 = vmax.f32 %v441, 0.0
        %v443 = vstv %s435
        %v444 = vmul.f32 %v443, %v442
        %v445 = vadd.f32 %v434, %v444
        %s446 = sld [smem:[#allocation10 + $0xf]]
        %s447 = sld [smem:[#allocation7 + $0xf]]
        %v448 = vstv %s447
        %v449 = vmul.f32 %v448, %v280
        %s450 = sld [smem:[#allocation8 + $0xf]]
        %v451 = vstv %s450
        %v452 = vadd.f32 %v449, %v451
        %v453 = vmax.f32 %v452, 0.0
        %v454 = vstv %s446
        %v455 = vmul.f32 %v454, %v453
        %v456 = vadd.f32 %v445, %v455
        %s457 = sld [smem:[#allocation10 + $0x10]]
        %s458 = sld [smem:[#allocation7 + $0x10]]
        %v459 = vstv %s458
        %v460 = vmul.f32 %v459, %v280
        %s461 = sld [smem:[#allocation8 + $0x10]]
        %v462 = vstv %s461
        %v463 = vadd.f32 %v460, %v462
        %v464 = vmax.f32 %v463, 0.0
        %v465 = vstv %s457
        %v466 = vmul.f32 %v465, %v464
        %v467 = vadd.f32 %v456, %v466
        %s468 = sld [smem:[#allocation10 + $0x11]]
        %s469 = sld [smem:[#allocation7 + $0x11]]
        %v470 = vstv %s469
        %v471 = vmul.f32 %v470, %v280
        %s472 = sld [smem:[#allocation8 + $0x11]]
        %v473 = vstv %s472
        %v474 = vadd.f32 %v471, %v473
        %v475 = vmax.f32 %v474, 0.0
        %v476 = vstv %s468
        %v477 = vmul.f32 %v476, %v475
        %v478 = vadd.f32 %v467, %v477
        %s479 = sld [smem:[#allocation10 + $0x12]]
        %s480 = sld [smem:[#allocation7 + $0x12]]
        %v481 = vstv %s480
        %v482 = vmul.f32 %v481, %v280
        %s483 = sld [smem:[#allocation8 + $0x12]]
        %v484 = vstv %s483
        %v485 = vadd.f32 %v482, %v484
        %v486 = vmax.f32 %v485, 0.0
        %v487 = vstv %s479
        %v488 = vmul.f32 %v487, %v486
        %v489 = vadd.f32 %v478, %v488
        %s490 = sld [smem:[#allocation10 + $0x13]]
        %s491 = sld [smem:[#allocation7 + $0x13]]
        %v492 = vstv %s491
        %v493 = vmul.f32 %v492, %v280
        %s494 = sld [smem:[#allocation8 + $0x13]]
        %v495 = vstv %s494
        %v496 = vadd.f32 %v493, %v495
        %v497 = vmax.f32 %v496, 0.0
        %v498 = vstv %s490
        %v499 = vmul.f32 %v498, %v497
        %v500 = vadd.f32 %v489, %v499
        %s501 = sld [smem:[#allocation10 + $0x14]]
        %s502 = sld [smem:[#allocation7 + $0x14]]
        %v503 = vstv %s502
        %v504 = vmul.f32 %v503, %v280
        %s505 = sld [smem:[#allocation8 + $0x14]]
        %v506 = vstv %s505
        %v507 = vadd.f32 %v504, %v506
        %v508 = vmax.f32 %v507, 0.0
        %v509 = vstv %s501
        %v510 = vmul.f32 %v509, %v508
        %v511 = vadd.f32 %v500, %v510
        %s512 = sld [smem:[#allocation10 + $0x15]]
        %s513 = sld [smem:[#allocation7 + $0x15]]
        %v514 = vstv %s513
        %v515 = vmul.f32 %v514, %v280
        %s516 = sld [smem:[#allocation8 + $0x15]]
        %v517 = vstv %s516
        %v518 = vadd.f32 %v515, %v517
        %v519 = vmax.f32 %v518, 0.0
        %v520 = vstv %s512
        %v521 = vmul.f32 %v520, %v519
        %v522 = vadd.f32 %v511, %v521
        %s523 = sld [smem:[#allocation10 + $0x16]]
        %s524 = sld [smem:[#allocation7 + $0x16]]
        %v525 = vstv %s524
        %v526 = vmul.f32 %v525, %v280
        %s527 = sld [smem:[#allocation8 + $0x16]]
        %v528 = vstv %s527
        %v529 = vadd.f32 %v526, %v528
        %v530 = vmax.f32 %v529, 0.0
        %v531 = vstv %s523
        %v532 = vmul.f32 %v531, %v530
        %v533 = vadd.f32 %v522, %v532
        %s534 = sld [smem:[#allocation10 + $0x17]]
        %s535 = sld [smem:[#allocation7 + $0x17]]
        %v536 = vstv %s535
        %v537 = vmul.f32 %v536, %v280
        %s538 = sld [smem:[#allocation8 + $0x17]]
        %v539 = vstv %s538
        %v540 = vadd.f32 %v537, %v539
        %v541 = vmax.f32 %v540, 0.0
        %v542 = vstv %s534
        %v543 = vmul.f32 %v542, %v541
        %v544 = vadd.f32 %v533, %v543
        %s545 = sld [smem:[#allocation10 + $0x18]]
        %s546 = sld [smem:[#allocation7 + $0x18]]
        %v547 = vstv %s546
        %v548 = vmul.f32 %v547, %v280
        %s549 = sld [smem:[#allocation8 + $0x18]]
        %v550 = vstv %s549
        %v551 = vadd.f32 %v548, %v550
        %v552 = vmax.f32 %v551, 0.0
        %v553 = vstv %s545
        %v554 = vmul.f32 %v553, %v552
        %v555 = vadd.f32 %v544, %v554
        %s556 = sld [smem:[#allocation10 + $0x19]]
        %s557 = sld [smem:[#allocation7 + $0x19]]
        %v558 = vstv %s557
        %v559 = vmul.f32 %v558, %v280
        %s560 = sld [smem:[#allocation8 + $0x19]]
        %v561 = vstv %s560
        %v562 = vadd.f32 %v559, %v561
        %v563 = vmax.f32 %v562, 0.0
        %v564 = vstv %s556
        %v565 = vmul.f32 %v564, %v563
        %v566 = vadd.f32 %v555, %v565
        %s567 = sld [smem:[#allocation10 + $0x1a]]
        %s568 = sld [smem:[#allocation7 + $0x1a]]
        %v569 = vstv %s568
        %v570 = vmul.f32 %v569, %v280
        %s571 = sld [smem:[#allocation8 + $0x1a]]
        %v572 = vstv %s571
        %v573 = vadd.f32 %v570, %v572
        %v574 = vmax.f32 %v573, 0.0
        %v575 = vstv %s567
        %v576 = vmul.f32 %v575, %v574
        %v577 = vadd.f32 %v566, %v576
        %s578 = sld [smem:[#allocation10 + $0x1b]]
        %s579 = sld [smem:[#allocation7 + $0x1b]]
        %v580 = vstv %s579
        %v581 = vmul.f32 %v580, %v280
        %s582 = sld [smem:[#allocation8 + $0x1b]]
        %v583 = vstv %s582
        %v584 = vadd.f32 %v581, %v583
        %v585 = vmax.f32 %v584, 0.0
        %v586 = vstv %s578
        %v587 = vmul.f32 %v586, %v585
        %v588 = vadd.f32 %v577, %v587
        %s589 = sld [smem:[#allocation10 + $0x1c]]
        %s590 = sld [smem:[#allocation7 + $0x1c]]
        %v591 = vstv %s590
        %v592 = vmul.f32 %v591, %v280
        %s593 = sld [smem:[#allocation8 + $0x1c]]
        %v594 = vstv %s593
        %v595 = vadd.f32 %v592, %v594
        %v596 = vmax.f32 %v595, 0.0
        %v597 = vstv %s589
        %v598 = vmul.f32 %v597, %v596
        %v599 = vadd.f32 %v588, %v598
        %s600 = sld [smem:[#allocation10 + $0x1d]]
        %s601 = sld [smem:[#allocation7 + $0x1d]]
        %v602 = vstv %s601
        %v603 = vmul.f32 %v602, %v280
        %s604 = sld [smem:[#allocation8 + $0x1d]]
        %v605 = vstv %s604
        %v606 = vadd.f32 %v603, %v605
        %v607 = vmax.f32 %v606, 0.0
        %v608 = vstv %s600
        %v609 = vmul.f32 %v608, %v607
        %v610 = vadd.f32 %v599, %v609
        %s611 = sld [smem:[#allocation10 + $0x1e]]
        %s612 = sld [smem:[#allocation7 + $0x1e]]
        %v613 = vstv %s612
        %v614 = vmul.f32 %v613, %v280
        %s615 = sld [smem:[#allocation8 + $0x1e]]
        %v616 = vstv %s615
        %v617 = vadd.f32 %v614, %v616
        %v618 = vmax.f32 %v617, 0.0
        %v619 = vstv %s611
        %v620 = vmul.f32 %v619, %v618
        %v621 = vadd.f32 %v610, %v620
        %s622 = sld [smem:[#allocation10 + $0x1f]]
        %s623 = sld [smem:[#allocation7 + $0x1f]]
        %v624 = vstv %s623
        %v625 = vmul.f32 %v624, %v280
        %s626 = sld [smem:[#allocation8 + $0x1f]]
        %v627 = vstv %s626
        %v628 = vadd.f32 %v625, %v627
        %v629 = vmax.f32 %v628, 0.0
        %v630 = vstv %s622
        %v631 = vmul.f32 %v630, %v629
        %v632 = vadd.f32 %v621, %v631
        %s633 = sld [smem:[#allocation2]]
        %v634 = vstv %s633
        %v635 = vadd.f32 %v632, %v634
        %636 = vst [vmem:[%s279] sm:$0xff] %v635
        %s637 = sand.u32 %s143, 1
        %s638 = scalar_lea.sflag [#allocation5], %s637
        %s639 = sand.u32 %s143, 1
        %s640 = smul.addr %s639, 8
        %s641 = scalar_lea.vmem [#allocation11], %s640
        // Predicated region
        $region57: #{tpu_custom_call.1} parent=39 // pred_check
          %p642 = pneg %p153
        $region58: #{tpu_custom_call.1} parent=39 // pred_check_branch
          %644 = sbr.rel (%p642) target = $region60
        $region59: #{tpu_custom_call.1} parent=39 // pred_region
          %s646 = ssub.s32 128, 128
          %647 = vsyncadd %s638, %s646
          %s648 = smul.addr %s25, 128
          %s649 = scalar_lea.hbm %s5, %s648
          %s651 = sshll.u32 %s641, 4
          %s652 = int_to_ptr.vmem [resolvable:$true] %s651
          %654 = dma.vmem_to_hbm [thread:$0]  %s652, 128, %s649, %s638
        $region60: #{tpu_custom_call.1} parent=39 // pred_fallthru
          _
      $region40: #{tpu_custom_call.1} parent=5 // pred_fallthru
        _
      %p655 = scmp.le.s32.totalorder 2, %s20
      // Predicated region
      $region61: #{tpu_custom_call.1} parent=5 // pred_check
        %p656 = pneg %p655
      $region62: #{tpu_custom_call.1} parent=5 // pred_check_branch
        %658 = sbr.rel (%p656) target = $region64
      $region63: #{tpu_custom_call.1} parent=5 // pred_region
        %s659 = ssub.s32 %s20, 2
        // Predicated region
        $region65: #{tpu_custom_call.1} parent=63 // pred_check
          %p660 = pneg %p159
        $region66: #{tpu_custom_call.1} parent=63 // pred_check_branch
          %662 = sbr.rel (%p660) target = $region68
        $region67: #{tpu_custom_call.1} parent=63 // pred_region
          %s663 = sand.u32 %s144, 1
          %s664 = scalar_lea.sflag [#allocation5], %s663
          %s665 = sand.u32 %s144, 1
          %s666 = smul.addr %s665, 8
          %s667 = scalar_lea.vmem [#allocation11], %s666
          %668 = dma.done %s664, 128
        $region68: #{tpu_custom_call.1} parent=63 // pred_fallthru
          _
      $region64: #{tpu_custom_call.1} parent=5 // pred_fallthru
        _
    $region6: #{tpu_custom_call.1} parent=1 // loop_footer
      %s24 = sadd.s32 1, %s20
    $region7: #{tpu_custom_call.1} parent=1 // loop_footer_branch
      %19 = sbr.rel target = $region3
    $region8: #{tpu_custom_call.1} parent=1 // loop_exit
      _
    %669 = vsyncpa [#allocation4], 1
    %s670 = scalar_lea.sflag [#allocation4], 1
    %671 = vsyncpa %s670, 1
    %672 = vsyncpa [#allocation5], 1
    %s673 = scalar_lea.sflag [#allocation5], 1
    %674 = vsyncpa %s673, 1
    %675 = vsyncpa [#allocation6], 1
    %s676 = scalar_lea.sflag [#allocation6], 1
    %677 = vsyncpa %s676, 1
    %678 = vsyncpa [#allocation9], 1

</llo_original>
